<compile_context>
chip_gen: v5e
topology: v5e:2x2
jax: 0.10.0
libtpu: 0.0.40
codegen_flags: <defaults>
</compile_context>

<pallas_src>
import functools
import math

import jax
import jax.numpy as jnp
from jax.experimental import pallas as pl
from jax.experimental.pallas import tpu as pltpu


def _softplus(x):
    # Numerically stable log(1 + exp(x)).
    return jnp.maximum(x, 0.0) + jnp.log(1.0 + jnp.exp(-jnp.abs(x)))


def _round_up(n, m):
    return ((n + m - 1) // m) * m


def _bayes_linear_kernel(
    x_ref,      # (tb, in_pad)   matmul_dtype, blocked on batch axis i
    wmu_ref,    # (in_pad, tn)   f32, blocked on out axis j (single-buffered)
    wrho_ref,   # (in_pad, tn)   f32
    weps_ref,   # (in_pad, tn)   f32
    bias_ref,   # (3, tn)        f32 rows = [bias_mu; bias_rho; bias_eps]
    out_ref,    # (tb, tn)       f32, blocked on (i, j)
    kl_ref,     # (1,)           f32 SMEM scalar, accumulated over j
    w_smp_ref,  # (in_pad, tn)   matmul_dtype scratch: sampled W column block
    b_smp_ref,  # (1, tn)        f32 scratch: sampled bias slice
    *, in_dim, out_dim, prior_mu, half_inv_prior_cov, kl_const,
    needs_row_mask, needs_col_mask,
):
    j = pl.program_id(0)   # output-column block (outer)
    i = pl.program_id(1)   # batch tile (inner)

    @pl.when((j == 0) & (i == 0))
    def _init_kl():
        kl_ref[0] = jnp.float32(kl_const)

    # ---- one-time (per column block) sampling + partial KL: batch-invariant --------
    @pl.when(i == 0)
    def _sample_and_kl():
        in_pad, tn = wmu_ref.shape

        wmu = wmu_ref[...]
        w_std = _softplus(wrho_ref[...])
        # Sample straight into the matmul dtype -> no per-batch-tile cast later.
        w_smp_ref[...] = (wmu + weps_ref[...] * w_std).astype(w_smp_ref.dtype)

        bmu = bias_ref[0:1, :]
        b_std = _softplus(bias_ref[1:2, :])
        b_smp_ref[...] = bmu + bias_ref[2:3, :] * b_std

        # Fused per-element KL (prior constants folded into kl_const at (0,0)):
        #   kl_elem = 0.5/prior_cov * (std^2 + (mu-mu0)^2) - log(std)
        w_kl = half_inv_prior_cov * (w_std * w_std + (wmu - prior_mu) ** 2) - jnp.log(w_std)
        if needs_row_mask or needs_col_mask:
            mask = None
            if needs_row_mask:
                mask = jax.lax.broadcasted_iota(jnp.int32, (in_pad, tn), 0) < in_dim
            if needs_col_mask:
                col = j * tn + jax.lax.broadcasted_iota(jnp.int32, (in_pad, tn), 1)
                cmask = col < out_dim
                mask = cmask if mask is None else (mask & cmask)
            w_kl = jnp.where(mask, w_kl, 0.0)
        kl_partial = jnp.sum(w_kl)

        b_kl = half_inv_prior_cov * (b_std * b_std + (bmu - prior_mu) ** 2) - jnp.log(b_std)
        if needs_col_mask:
            bcol = j * tn + jax.lax.broadcasted_iota(jnp.int32, (1, tn), 1)
            b_kl = jnp.where(bcol < out_dim, b_kl, 0.0)
        kl_partial = kl_partial + jnp.sum(b_kl)

        kl_ref[0] = kl_ref[0] + kl_partial.astype(jnp.float32)

    # ---- per-batch-tile matmul using the resident sampled column block -------------
    out = jnp.dot(x_ref[...], w_smp_ref[...], preferred_element_type=jnp.float32)
    out_ref[...] = (out + b_smp_ref[...]).astype(out_ref.dtype)


def bayes_linear_normalq_forward(
    x, params, epsilons, *, prior_mu=0.0, prior_sigma=1.0,
    batch_tile=256, out_tile=512, matmul_dtype=jnp.bfloat16,
):
    """Pallas equivalent of BayesLinear_Normalq.forward(x, sample=True) -> (output, KL)."""
    wmu = params["weight_mus"].astype(jnp.float32)
    wrho = params["weight_rhos"].astype(jnp.float32)
    bmu = params["bias_mus"].astype(jnp.float32)
    brho = params["bias_rhos"].astype(jnp.float32)
    weps = epsilons["weight_eps"].astype(jnp.float32)
    beps = epsilons["bias_eps"].astype(jnp.float32)

    in_dim, out_dim = wmu.shape
    x2d = x.reshape(-1, in_dim)
    batch = x2d.shape[0]

    # Lane-dense padding; out dim padded to a multiple of the column tile tn.
    in_pad = _round_up(in_dim, 128)
    out_min = _round_up(out_dim, 128)
    tn = min(_round_up(out_tile, 128), out_min)
    out_pad = _round_up(out_dim, tn)
    nj = out_pad // tn

    tb = _round_up(min(batch_tile, max(batch, 1)), 8)
    batch_pad = _round_up(batch, tb)
    ni = batch_pad // tb

    def pad2(a, r, c):
        return jnp.pad(a, ((0, r - a.shape[0]), (0, c - a.shape[1])))

    # x is cast to the MXU dtype in the wrapper (halves the streamed DMA for bf16).
    x_p = pad2(x2d.astype(jnp.float32), batch_pad, in_pad).astype(matmul_dtype)
    wmu_p = pad2(wmu, in_pad, out_pad)
    wrho_p = pad2(wrho, in_pad, out_pad)
    weps_p = pad2(weps, in_pad, out_pad)
    # Pack the three tiny bias vectors into one lane-dense array -> single DMA per block.
    bias_p = pad2(jnp.stack([bmu, brho, beps], axis=0), 3, out_pad)

    prior_cov = float(prior_sigma) ** 2
    n_w, n_b = in_dim * out_dim, out_dim
    kl_const = 0.5 * (n_w + n_b) * math.log(prior_cov) - 0.5 * (n_w + n_b)

    kernel = functools.partial(
        _bayes_linear_kernel,
        in_dim=in_dim, out_dim=out_dim,
        prior_mu=float(prior_mu),
        half_inv_prior_cov=0.5 / prior_cov,
        kl_const=kl_const,
        needs_row_mask=(in_dim != in_pad),
        needs_col_mask=(out_dim != out_pad),
    )

    # Parameter inputs only change on the outer j axis -> single-buffer them.
    param_mode = pl.Buffered(1)

    mm_itemsize = jnp.dtype(matmul_dtype).itemsize
    footprint = (
        2 * tb * in_pad * mm_itemsize            # x tiles (double-buffered)
        + 2 * tb * tn * 4                        # out tiles (double-buffered)
        + 3 * in_pad * tn * 4 + 3 * tn * 4       # params (single-buffered)
        + in_pad * tn * mm_itemsize + tn * 4     # sampled scratch
    )
    vmem_limit_bytes = int(min(max(footprint * 1.5 + (8 << 20), 32 << 20), 128 << 20))

    out_p, kl = pl.pallas_call(
        kernel,
        out_shape=(
            jax.ShapeDtypeStruct((batch_pad, out_pad), jnp.float32),
            jax.ShapeDtypeStruct((1,), jnp.float32),
        ),
        grid_spec=pltpu.PrefetchScalarGridSpec(
            num_scalar_prefetch=0,
            grid=(nj, ni),  # j (output-column blocks) outer, i (batch tiles) inner
            in_specs=[
                pl.BlockSpec((tb, in_pad), lambda j, i: (i, 0)),      # x: pipelined
                pl.BlockSpec((in_pad, tn), lambda j, i: (0, j),
                             pipeline_mode=param_mode),               # weight_mu
                pl.BlockSpec((in_pad, tn), lambda j, i: (0, j),
                             pipeline_mode=param_mode),               # weight_rho
                pl.BlockSpec((in_pad, tn), lambda j, i: (0, j),
                             pipeline_mode=param_mode),               # weight_eps
                pl.BlockSpec((3, tn), lambda j, i: (0, j),
                             pipeline_mode=param_mode),               # packed bias rows
            ],
            out_specs=(
                pl.BlockSpec((tb, tn), lambda j, i: (i, j)),
                pl.BlockSpec((1,), lambda j, i: (0,),
                             memory_space=pltpu.MemorySpace.SMEM),    # scalar KL
            ),
            scratch_shapes=[
                pltpu.VMEM((in_pad, tn), matmul_dtype),  # sampled W column block
                pltpu.VMEM((1, tn), jnp.float32),        # sampled bias slice
            ],
        ),
        compiler_params=pltpu.CompilerParams(
            # 'arbitrary': sampled scratch is written at i==0 and KL accumulates in one
            # SMEM scalar, so neither axis may be megacore-sharded as written.
            dimension_semantics=("arbitrary", "arbitrary"),
            vmem_limit_bytes=vmem_limit_bytes,
        ),
    )(x_p, wmu_p, wrho_p, weps_p, bias_p)

    return out_p[:batch, :out_dim], kl[0]


def init_params(key_p, key_e, input_dim, output_dim):
    """Deterministic init matching BayesLinear_Normalq.__init__ distributions."""
    k = jax.random.split(key_p, 3)
    params = {
        "weight_mus": jax.random.uniform(k[0], (input_dim, output_dim), jnp.float32, -0.01, 0.01),
        "weight_rhos": jnp.full((input_dim, output_dim), -3.0, jnp.float32),  # uniform(-3,-3)
        "bias_mus": jax.random.uniform(k[1], (output_dim,), jnp.float32, -0.01, 0.01),
        "bias_rhos": jax.random.uniform(k[2], (output_dim,), jnp.float32, -4.0, -3.0),
    }
    ek = jax.random.split(key_e, 2)
    # TODO(synk): epsilons are drawn in plain-JAX glue (as torch draws .normal_() outside
    #             the matmul); an in-kernel pltpu.prng path would change the RNG stream.
    epsilons = {
        "weight_eps": jax.random.normal(ek[0], (input_dim, output_dim), jnp.float32),
        "bias_eps": jax.random.normal(ek[1], (output_dim,), jnp.float32),
    }
    return params, epsilons


def _reference(x, params, epsilons, prior_mu=0.0, prior_sigma=1.0):
    """Pure-JAX mirror of the torch forward (sample=True) for correctness checking."""
    wmu, wrho = params["weight_mus"], params["weight_rhos"]
    bmu, brho = params["bias_mus"], params["bias_rhos"]
    weps, beps = epsilons["weight_eps"], epsilons["bias_eps"]
    prior_cov = prior_sigma ** 2

    w_std = jnp.log(1.0 + jnp.exp(wrho))
    b_std = jnp.log(1.0 + jnp.exp(brho))
    w = wmu + weps * w_std
    b = bmu + beps * b_std
    out = x.reshape(-1, wmu.shape[0]) @ w + b

    kl = 0.5 * jnp.sum(jnp.log(prior_cov / w_std ** 2)) - 0.5 * w_std.size
    kl += 0.5 * jnp.sum(w_std ** 2 / prior_cov)
    kl += 0.5 * jnp.sum((wmu - prior_mu) ** 2 / prior_cov)
    kl += 0.5 * jnp.sum(jnp.log(prior_cov / b_std ** 2)) - 0.5 * b_std.size
    kl += 0.5 * jnp.sum(b_std ** 2 / prior_cov)
    kl += 0.5 * jnp.sum((bmu - prior_mu) ** 2 / prior_cov)
    return out, kl


if __name__ == "__main__":
    key = jax.random.PRNGKey(0)
    kp, ke, kx = jax.random.split(key, 3)

    input_dim, output_dim, batch = 16, 32, 8
    params, epsilons = init_params(kp, ke, input_dim, output_dim)
    x = jax.random.normal(kx, (batch, input_dim), jnp.float32)
    ref_out, ref_kl = _reference(x, params, epsilons)

    # f32 MXU path: tight tolerances.
    out, kl = bayes_linear_normalq_forward(x, params, epsilons, matmul_dtype=jnp.float32)
    out, kl = jax.block_until_ready((out, kl))
    assert out.shape == (batch, output_dim)
    assert jnp.allclose(out, ref_out, atol=1e-4, rtol=1e-4)
    assert jnp.allclose(kl, ref_kl, atol=1e-2, rtol=1e-4)

    # Default bf16 MXU path: looser output tolerance (KL is computed fully in f32).
    out_bf, kl_bf = bayes_linear_normalq_forward(x, params, epsilons)
    out_bf, kl_bf = jax.block_until_ready((out_bf, kl_bf))
    assert out_bf.shape == (batch, output_dim)
    assert jnp.allclose(out_bf, ref_out, atol=3e-2, rtol=3e-2)
    assert jnp.allclose(kl_bf, ref_kl, atol=1e-2, rtol=1e-4)

    # Multi-tile check: 2 output-column blocks x 3 batch tiles -> exercises both grid
    # axes, KL accumulation across j, padding masks, and sampled-scratch reuse across i.
    in2, outdim2, b2 = 48, 200, 40
    params2, eps2 = init_params(jax.random.PRNGKey(1), jax.random.PRNGKey(2), in2, outdim2)
    x2 = jax.random.normal(jax.random.PRNGKey(3), (b2, in2), jnp.float32)
    out2, kl2 = bayes_linear_normalq_forward(
        x2, params2, eps2, batch_tile=16, out_tile=128, matmul_dtype=jnp.float32)
    out2, kl2 = jax.block_until_ready((out2, kl2))
    ref_out2, ref_kl2 = _reference(x2, params2, eps2)
    assert out2.shape == (b2, outdim2)
    assert jnp.allclose(out2, ref_out2, atol=1e-4, rtol=1e-4)
    assert jnp.allclose(kl2, ref_kl2, atol=1e-2, rtol=1e-4)

    print("KERNEL_OK")
</pallas_src>

<mosaic_0001>
module attributes {stable_mosaic.version = 11 : i64} {
  func.func @_bayes_linear_kernel(%arg0: i32, %arg1: i32, %arg2: memref<8x128xf32, #tpu.memory_space<vmem>>, %arg3: memref<128x128xf32, #tpu.memory_space<vmem>>, %arg4: memref<128x128xf32, #tpu.memory_space<vmem>>, %arg5: memref<128x128xf32, #tpu.memory_space<vmem>>, %arg6: memref<3x128xf32, #tpu.memory_space<vmem>>, %arg7: memref<8x128xf32, #tpu.memory_space<vmem>>, %arg8: memref<1xf32, #tpu.memory_space<smem>>, %arg9: memref<128x128xf32, #tpu.memory_space<vmem>>, %arg10: memref<1x128xf32, #tpu.memory_space<vmem>>) attributes {dimension_semantics = [#tpu.dimension_semantics<arbitrary>, #tpu.dimension_semantics<arbitrary>], iteration_bounds = array<i64: 1, 1>, scalar_prefetch = 0 : i64, scratch_operands = 2 : i64, tpu.core_type = #tpu.core_type<tc>, window_params = [{transform_indices = @transform_0, window_bounds = array<i64: 8, 128>}, {pipeline_mode = #tpu.pipeline_mode<synchronous>, transform_indices = @transform_1, window_bounds = array<i64: 128, 128>}, {pipeline_mode = #tpu.pipeline_mode<synchronous>, transform_indices = @transform_2, window_bounds = array<i64: 128, 128>}, {pipeline_mode = #tpu.pipeline_mode<synchronous>, transform_indices = @transform_3, window_bounds = array<i64: 128, 128>}, {pipeline_mode = #tpu.pipeline_mode<synchronous>, transform_indices = @transform_4, window_bounds = array<i64: 3, 128>}, {transform_indices = @transform_5, window_bounds = array<i64: 8, 128>}, {transform_indices = @transform_6, window_bounds = array<i64: 1>}]} {
    %c0_i32 = arith.constant 0 : i32
    %0 = arith.cmpi eq, %arg0, %c0_i32 : i32
    %c0_i32_0 = arith.constant 0 : i32
    %1 = arith.cmpi eq, %arg1, %c0_i32_0 : i32
    %2 = arith.andi %0, %1 : i1
    %3 = arith.extui %2 : i1 to i32
    %c0_i32_1 = arith.constant 0 : i32
    %4 = arith.cmpi ne, %3, %c0_i32_1 : i32
    scf.if %4 {
      %cst_11 = arith.constant -2.720000e+02 : f32
      %c0_12 = arith.constant 0 : index
      %15 = memref.load %arg8[%c0_12] : memref<1xf32, #tpu.memory_space<smem>>
      memref.store %cst_11, %arg8[%c0_12] : memref<1xf32, #tpu.memory_space<smem>>
    } else {
    }
    %c0_i32_2 = arith.constant 0 : i32
    %5 = arith.cmpi eq, %arg1, %c0_i32_2 : i32
    %6 = arith.extui %5 : i1 to i32
    %c0_i32_3 = arith.constant 0 : i32
    %7 = arith.cmpi ne, %6, %c0_i32_3 : i32
    scf.if %7 {
      %c0_11 = arith.constant 0 : index
      %c0_12 = arith.constant 0 : index
      %15 = vector.load %arg3[%c0_11, %c0_12] : memref<128x128xf32, #tpu.memory_space<vmem>>, vector<128x128xf32>
      %c0_13 = arith.constant 0 : index
      %c0_14 = arith.constant 0 : index
      %16 = vector.load %arg4[%c0_13, %c0_14] : memref<128x128xf32, #tpu.memory_space<vmem>>, vector<128x128xf32>
      %cst_15 = arith.constant 0.000000e+00 : f32
      %17 = vector.broadcast %cst_15 : f32 to vector<128x128xf32>
      %18 = arith.maximumf %16, %17 : vector<128x128xf32>
      %19 = math.absf %16 : vector<128x128xf32>
      %cst_16 = arith.constant 0.000000e+00 : f32
      %20 = vector.broadcast %cst_16 : f32 to vector<128x128xf32>
      %21 = arith.subf %20, %19 : vector<128x128xf32>
      %22 = math.exp %21 : vector<128x128xf32>
      %cst_17 = arith.constant 1.000000e+00 : f32
      %23 = vector.broadcast %cst_17 : f32 to vector<128x128xf32>
      %24 = arith.addf %23, %22 : vector<128x128xf32>
      %25 = math.log %24 : vector<128x128xf32>
      %26 = arith.addf %18, %25 : vector<128x128xf32>
      %c0_18 = arith.constant 0 : index
      %c0_19 = arith.constant 0 : index
      %27 = vector.load %arg5[%c0_18, %c0_19] : memref<128x128xf32, #tpu.memory_space<vmem>>, vector<128x128xf32>
      %28 = arith.mulf %27, %26 : vector<128x128xf32>
      %29 = arith.addf %15, %28 : vector<128x128xf32>
      %c0_20 = arith.constant 0 : index
      %c0_21 = arith.constant 0 : index
      %30 = vector.load %arg9[%c0_20, %c0_21] : memref<128x128xf32, #tpu.memory_space<vmem>>, vector<128x128xf32>
      tpu.vector_store %arg9[%c0_20, %c0_21], %29 {strides = array<i32>} : memref<128x128xf32, #tpu.memory_space<vmem>>, vector<128x128xf32>,
      %c0_22 = arith.constant 0 : index
      %c0_23 = arith.constant 0 : index
      %31 = vector.load %arg6[%c0_22, %c0_23] : memref<3x128xf32, #tpu.memory_space<vmem>>, vector<1x128xf32>
      %c1 = arith.constant 1 : index
      %c0_24 = arith.constant 0 : index
      %32 = vector.load %arg6[%c1, %c0_24] : memref<3x128xf32, #tpu.memory_space<vmem>>, vector<1x128xf32>
      %cst_25 = arith.constant 0.000000e+00 : f32
      %33 = vector.broadcast %cst_25 : f32 to vector<1x128xf32>
      %34 = arith.maximumf %32, %33 : vector<1x128xf32>
      %35 = math.absf %32 : vector<1x128xf32>
      %cst_26 = arith.constant 0.000000e+00 : f32
      %36 = vector.broadcast %cst_26 : f32 to vector<1x128xf32>
      %37 = arith.subf %36, %35 : vector<1x128xf32>
      %38 = math.exp %37 : vector<1x128xf32>
      %cst_27 = arith.constant 1.000000e+00 : f32
      %39 = vector.broadcast %cst_27 : f32 to vector<1x128xf32>
      %40 = arith.addf %39, %38 : vector<1x128xf32>
      %41 = math.log %40 : vector<1x128xf32>
      %42 = arith.addf %34, %41 : vector<1x128xf32>
      %c2 = arith.constant 2 : index
      %c0_28 = arith.constant 0 : index
      %43 = vector.load %arg6[%c2, %c0_28] : memref<3x128xf32, #tpu.memory_space<vmem>>, vector<1x128xf32>
      %44 = arith.mulf %43, %42 : vector<1x128xf32>
      %45 = arith.addf %31, %44 : vector<1x128xf32>
      %c0_29 = arith.constant 0 : index
      %c0_30 = arith.constant 0 : index
      %46 = vector.load %arg10[%c0_29, %c0_30] : memref<1x128xf32, #tpu.memory_space<vmem>>, vector<1x128xf32>
      tpu.vector_store %arg10[%c0_29, %c0_30], %45 {strides = array<i32>} : memref<1x128xf32, #tpu.memory_space<vmem>>, vector<1x128xf32>,
      %47 = arith.mulf %26, %26 : vector<128x128xf32>
      %cst_31 = arith.constant 0.000000e+00 : f32
      %48 = vector.broadcast %cst_31 : f32 to vector<128x128xf32>
      %49 = arith.subf %15, %48 : vector<128x128xf32>
      %50 = arith.mulf %49, %49 : vector<128x128xf32>
      %51 = arith.addf %47, %50 : vector<128x128xf32>
      %cst_32 = arith.constant 5.000000e-01 : f32
      %52 = vector.broadcast %cst_32 : f32 to vector<128x128xf32>
      %53 = arith.mulf %52, %51 : vector<128x128xf32>
      %54 = math.log %26 : vector<128x128xf32>
      %55 = arith.subf %53, %54 : vector<128x128xf32>
      %56 = tpu.iota {dimensions = array<i32: 0>} : vector<128x128xi32>
      %c16_i32 = arith.constant 16 : i32
      %57 = vector.broadcast %c16_i32 : i32 to vector<128x128xi32>
      %58 = arith.cmpi slt, %56, %57 : vector<128x128xi32>
      %c128_i32 = arith.constant 128 : i32
      %59 = arith.muli %arg0, %c128_i32 : i32
      %60 = tpu.iota {dimensions = array<i32: 1>} : vector<128x128xi32>
      %61 = vector.broadcast %59 : i32 to vector<128x128xi32>
      %62 = arith.addi %61, %60 : vector<128x128xi32>
      %c32_i32 = arith.constant 32 : i32
      %63 = vector.broadcast %c32_i32 : i32 to vector<128x128xi32>
      %64 = arith.cmpi slt, %62, %63 : vector<128x128xi32>
      %65 = arith.andi %58, %64 : vector<128x128xi1>
      %cst_33 = arith.constant 0.000000e+00 : f32
      %66 = vector.broadcast %cst_33 : f32 to vector<128x128xf32>
      %67 = arith.select %65, %55, %66 : vector<128x128xi1>, vector<128x128xf32>
      %68 = vector.shape_cast %67 : vector<128x128xf32> to vector<1x128x128xf32>
      %cst_34 = arith.constant dense<0.000000e+00> : vector<1xf32>
      %69 = vector.multi_reduction <add>, %68, %cst_34 [1, 2] : vector<1x128x128xf32> to vector<1xf32>
      %70 = vector.shape_cast %69 : vector<1xf32> to vector<1x1x1xf32>
      %71 = vector.extract %70[0, 0, 0] : f32 from vector<1x1x1xf32>
      %72 = arith.mulf %42, %42 : vector<1x128xf32>
      %cst_35 = arith.constant 0.000000e+00 : f32
      %73 = vector.broadcast %cst_35 : f32 to vector<1x128xf32>
      %74 = arith.subf %31, %73 : vector<1x128xf32>
      %75 = arith.mulf %74, %74 : vector<1x128xf32>
      %76 = arith.addf %72, %75 : vector<1x128xf32>
      %cst_36 = arith.constant 5.000000e-01 : f32
      %77 = vector.broadcast %cst_36 : f32 to vector<1x128xf32>
      %78 = arith.mulf %77, %76 : vector<1x128xf32>
      %79 = math.log %42 : vector<1x128xf32>
      %80 = arith.subf %78, %79 : vector<1x128xf32>
      %c128_i32_37 = arith.constant 128 : i32
      %81 = arith.muli %arg0, %c128_i32_37 : i32
      %82 = tpu.iota {dimensions = array<i32: 1>} : vector<1x128xi32>
      %83 = vector.broadcast %81 : i32 to vector<1x128xi32>
      %84 = arith.addi %83, %82 : vector<1x128xi32>
      %c32_i32_38 = arith.constant 32 : i32
      %85 = vector.broadcast %c32_i32_38 : i32 to vector<1x128xi32>
      %86 = arith.cmpi slt, %84, %85 : vector<1x128xi32>
      %cst_39 = arith.constant 0.000000e+00 : f32
      %87 = vector.broadcast %cst_39 : f32 to vector<1x128xf32>
      %88 = arith.select %86, %80, %87 : vector<1x128xi1>, vector<1x128xf32>
      %89 = vector.shape_cast %88 : vector<1x128xf32> to vector<1x1x128xf32>
      %cst_40 = arith.constant dense<0.000000e+00> : vector<1xf32>
      %90 = vector.multi_reduction <add>, %89, %cst_40 [1, 2] : vector<1x1x128xf32> to vector<1xf32>
      %91 = vector.shape_cast %90 : vector<1xf32> to vector<1x1x1xf32>
      %92 = vector.extract %91[0, 0, 0] : f32 from vector<1x1x1xf32>
      %93 = arith.addf %71, %92 : f32
      %c0_41 = arith.constant 0 : index
      %94 = memref.load %arg8[%c0_41] : memref<1xf32, #tpu.memory_space<smem>>
      %95 = arith.addf %94, %93 : f32
      %c0_42 = arith.constant 0 : index
      %96 = memref.load %arg8[%c0_42] : memref<1xf32, #tpu.memory_space<smem>>
      memref.store %95, %arg8[%c0_42] : memref<1xf32, #tpu.memory_space<smem>>
    } else {
    }
    %c0 = arith.constant 0 : index
    %c0_4 = arith.constant 0 : index
    %8 = vector.load %arg2[%c0, %c0_4] : memref<8x128xf32, #tpu.memory_space<vmem>>, vector<8x128xf32>
    %c0_5 = arith.constant 0 : index
    %c0_6 = arith.constant 0 : index
    %9 = vector.load %arg9[%c0_5, %c0_6] : memref<128x128xf32, #tpu.memory_space<vmem>>, vector<128x128xf32>
    %cst = arith.constant dense<0.000000e+00> : vector<8x128xf32>
    %10 = tpu.matmul %8, %9, %cst {dimension_numbers = #tpu.dot_dimension_numbers<[1], [0], [0], [1], [0, 0, 1, 1], [], []>} : vector<8x128xf32>, vector<128x128xf32>, vector<8x128xf32> -> vector<8x128xf32>
    %c0_7 = arith.constant 0 : index
    %c0_8 = arith.constant 0 : index
    %11 = vector.load %arg10[%c0_7, %c0_8] : memref<1x128xf32, #tpu.memory_space<vmem>>, vector<1x128xf32>
    %12 = vector.broadcast %11 : vector<1x128xf32> to vector<8x128xf32>
    %13 = arith.addf %10, %12 : vector<8x128xf32>
    %c0_9 = arith.constant 0 : index
    %c0_10 = arith.constant 0 : index
    %14 = vector.load %arg7[%c0_9, %c0_10] : memref<8x128xf32, #tpu.memory_space<vmem>>, vector<8x128xf32>
    tpu.vector_store %arg7[%c0_9, %c0_10], %13 {strides = array<i32>} : memref<8x128xf32, #tpu.memory_space<vmem>>, vector<8x128xf32>,
    return
  }
  func.func @transform_0(%arg0: i32, %arg1: i32) -> (i32, i32) {
    %c0_i32 = arith.constant 0 : i32
    %c0_i32_0 = arith.constant 0 : i32
    return %arg1, %c0_i32 : i32, i32
  }
  func.func @transform_1(%arg0: i32, %arg1: i32) -> (i32, i32) {
    %c0_i32 = arith.constant 0 : i32
    %c0_i32_0 = arith.constant 0 : i32
    return %c0_i32, %arg0 : i32, i32
  }
  func.func @transform_2(%arg0: i32, %arg1: i32) -> (i32, i32) {
    %c0_i32 = arith.constant 0 : i32
    %c0_i32_0 = arith.constant 0 : i32
    return %c0_i32, %arg0 : i32, i32
  }
  func.func @transform_3(%arg0: i32, %arg1: i32) -> (i32, i32) {
    %c0_i32 = arith.constant 0 : i32
    %c0_i32_0 = arith.constant 0 : i32
    return %c0_i32, %arg0 : i32, i32
  }
  func.func @transform_4(%arg0: i32, %arg1: i32) -> (i32, i32) {
    %c0_i32 = arith.constant 0 : i32
    %c0_i32_0 = arith.constant 0 : i32
    return %c0_i32, %arg0 : i32, i32
  }
  func.func @transform_5(%arg0: i32, %arg1: i32) -> (i32, i32) {
    %c0_i32 = arith.constant 0 : i32
    return %arg1, %arg0 : i32, i32
  }
  func.func @transform_6(%arg0: i32, %arg1: i32) -> i32 {
    %c0_i32 = arith.constant 0 : i32
    %c0_i32_0 = arith.constant 0 : i32
    return %c0_i32 : i32
  }
}

</mosaic_0001>

<llo_original>
// kernel: tpu_custom_call.1
$region0: #{tpu_custom_call.1}
  #allocation0 [shape = 'u32[]', space=smem, size = 0x4, offset = 0x4, fixed_abs, tag = 'smem constant byte address 0x4 - core index']
  #allocation1 [shape = 'u32[72,128]{1,0:T(1,128)}', space=vmem, size = 0x9000, scoped, tag = 'internal scratch']
  #allocation2 [shape = 'f32[128,128]{1,0:T(8,128)}', space=vmem, size = 0x10000, scoped, tag = 'scratch operand']
  #allocation3 [shape = 'f32[1,128]{1,0:T(1,128)}', space=vmem, size = 0x200, scoped, tag = 'scratch operand']
  %s0 = inlined_call_operand.hbm [shape: f32[8,128], index: 0, kind: input, shape index: {}]
  %s1 = inlined_call_operand.hbm [shape: f32[128,128], index: 1, kind: input, shape index: {}]
  %s2 = inlined_call_operand.hbm [shape: f32[128,128], index: 2, kind: input, shape index: {}]
  %s3 = inlined_call_operand.hbm [shape: f32[128,128], index: 3, kind: input, shape index: {}]
  %s4 = inlined_call_operand.hbm [shape: f32[3,128], index: 4, kind: input, shape index: {}]
  %s5 = inlined_call_operand.hbm [shape: f32[8,128], index: 5, kind: output, shape index: {0}]
  %s6 = inlined_call_operand.hbm [shape: f32[1], index: 6, kind: output, shape index: {1}]
  %7 = xla_tuple %s5, %s6
  %s8 = sld [smem:[#allocation0]]
  $region66: #{tpu_custom_call.1} parent=0
    _
  %s10 = ssub.s32 1, %s8
  %s11 = scalar_select 0, %s10, %s8
  $region1: #{tpu_custom_call.1} parent=0
    #allocation4 [shape = 'u8[4096]{0}', space=vmem, size = 0x1000, scoped, tag = 'input window, operand 0, single buffered']
    #allocation5 [shape = 's32[1]{0}', space=sflag, size = 0x4, scoped, tag = 'scoped memory for tpu_custom_call.1']
    #allocation6 [shape = 's32[1]{0}', space=sflag, size = 0x4, scoped, tag = 'scoped memory for tpu_custom_call.1']
    #allocation7 [shape = 's32[1]{0}', space=sflag, size = 0x4, scoped, tag = 'scoped memory for tpu_custom_call.1']
    #allocation8 [shape = 'u8[65536]{0}', space=vmem, size = 0x10000, scoped, tag = 'input window, operand 1, single buffered']
    #allocation9 [shape = 's32[1]{0}', space=sflag, size = 0x4, scoped, tag = 'scoped memory for tpu_custom_call.1']
    #allocation10 [shape = 'u8[65536]{0}', space=vmem, size = 0x10000, scoped, tag = 'input window, operand 2, single buffered']
    #allocation11 [shape = 'u8[65536]{0}', space=vmem, size = 0x10000, scoped, tag = 'input window, operand 3, single buffered']
    #allocation12 [shape = 's32[1]{0}', space=sflag, size = 0x4, scoped, tag = 'scoped memory for tpu_custom_call.1']
    #allocation13 [shape = 'u8[2048]{0}', space=vmem, size = 0x800, scoped, tag = 'input window, operand 4, single buffered']
    #allocation14 [shape = 'u8[4096]{0}', space=vmem, size = 0x1000, scoped, tag = 'output window, operand 0, single buffered']
    #allocation15 [shape = 'u8[512]{0}', space=smem, size = 0x200, scoped, tag = 'output window, operand 1, single buffered']
    %12 = vsyncpa [#allocation5], 0
    %13 = vsyncpa [#allocation9], 0
    %14 = vsyncpa [#allocation12], 0
    %15 = vsyncpa [#allocation6], 0
    %16 = vsyncpa [#allocation7], 0
    // Predicated region
    $region2: #{tpu_custom_call.1} parent=1 // pred_check
      _
    $region3: #{tpu_custom_call.1} parent=1 // pred_check_branch
      %18 = sbr.rel (0) target = $region5
    $region4: #{tpu_custom_call.1} parent=1 // pred_region
      %20 = vsyncadd [#allocation5], 0
      %s22 = sshll.u32 %s0, 4
      %s23 = int_to_ptr.hbm [resolvable:$true] %s22
      %s24 = sshll.u32 [#allocation4], 4
      %s25 = int_to_ptr.vmem [resolvable:$true] %s24
      %27 = dma.hbm_to_vmem [thread:$0]  %s23, 128, %s25, [#allocation5]
    $region5: #{tpu_custom_call.1} parent=1 // pred_fallthru
      _
    // Predicated region
    $region6: #{tpu_custom_call.1} parent=1 // pred_check
      _
    $region7: #{tpu_custom_call.1} parent=1 // pred_check_branch
      %29 = sbr.rel (0) target = $region9
    $region8: #{tpu_custom_call.1} parent=1 // pred_region
      %31 = vsyncadd [#allocation9], 0
      %s32 = sshll.u32 %s1, 4
      %s33 = int_to_ptr.hbm [resolvable:$true] %s32
      %s34 = sshll.u32 [#allocation8], 4
      %s35 = int_to_ptr.vmem [resolvable:$true] %s34
      %40 = dma.hbm_to_vmem [thread:$0]  %s33, 2048, %s35, [#allocation9], 128, 128, 8
    $region9: #{tpu_custom_call.1} parent=1 // pred_fallthru
      _
    // Predicated region
    $region10: #{tpu_custom_call.1} parent=1 // pred_check
      _
    $region11: #{tpu_custom_call.1} parent=1 // pred_check_branch
      %42 = sbr.rel (0) target = $region13
    $region12: #{tpu_custom_call.1} parent=1 // pred_region
      %44 = vsyncadd [#allocation9], 0
      %s45 = sshll.u32 %s2, 4
      %s46 = int_to_ptr.hbm [resolvable:$true] %s45
      %s47 = sshll.u32 [#allocation10], 4
      %s48 = int_to_ptr.vmem [resolvable:$true] %s47
      %53 = dma.hbm_to_vmem [thread:$0]  %s46, 2048, %s48, [#allocation9], 128, 128, 8
    $region13: #{tpu_custom_call.1} parent=1 // pred_fallthru
      _
    // Predicated region
    $region14: #{tpu_custom_call.1} parent=1 // pred_check
      _
    $region15: #{tpu_custom_call.1} parent=1 // pred_check_branch
      %55 = sbr.rel (0) target = $region17
    $region16: #{tpu_custom_call.1} parent=1 // pred_region
      %57 = vsyncadd [#allocation12], 0
      %s58 = sshll.u32 %s3, 4
      %s59 = int_to_ptr.hbm [resolvable:$true] %s58
      %s60 = sshll.u32 [#allocation11], 4
      %s61 = int_to_ptr.vmem [resolvable:$true] %s60
      %66 = dma.hbm_to_vmem [thread:$0]  %s59, 2048, %s61, [#allocation12], 128, 128, 8
    $region17: #{tpu_custom_call.1} parent=1 // pred_fallthru
      _
    // Predicated region
    $region18: #{tpu_custom_call.1} parent=1 // pred_check
      _
    $region19: #{tpu_custom_call.1} parent=1 // pred_check_branch
      %68 = sbr.rel (0) target = $region21
    $region20: #{tpu_custom_call.1} parent=1 // pred_region
      %70 = vsyncadd [#allocation12], 0
      %s72 = sshll.u32 %s4, 4
      %s73 = int_to_ptr.hbm [resolvable:$true] %s72
      %s74 = sshll.u32 [#allocation13], 4
      %s75 = int_to_ptr.vmem [resolvable:$true] %s74
      %77 = dma.hbm_to_vmem [thread:$0]  %s73, 64, %s75, [#allocation12]
    $region21: #{tpu_custom_call.1} parent=1 // pred_fallthru
      _
    // Predicated region
    $region22: #{tpu_custom_call.1} parent=1 // pred_check
      _
    $region23: #{tpu_custom_call.1} parent=1 // pred_check_branch
      %79 = sbr.rel (0) target = $region25
    $region24: #{tpu_custom_call.1} parent=1 // pred_region
      %81 = dma.done [#allocation5], 128
    $region25: #{tpu_custom_call.1} parent=1 // pred_fallthru
      _
    // Predicated region
    $region26: #{tpu_custom_call.1} parent=1 // pred_check
      _
    $region27: #{tpu_custom_call.1} parent=1 // pred_check_branch
      %83 = sbr.rel (0) target = $region29
    $region28: #{tpu_custom_call.1} parent=1 // pred_region
      %85 = dma.done [#allocation9], 2048
    $region29: #{tpu_custom_call.1} parent=1 // pred_fallthru
      _
    // Predicated region
    $region30: #{tpu_custom_call.1} parent=1 // pred_check
      _
    $region31: #{tpu_custom_call.1} parent=1 // pred_check_branch
      %87 = sbr.rel (0) target = $region33
    $region32: #{tpu_custom_call.1} parent=1 // pred_region
      %89 = dma.done [#allocation9], 2048
    $region33: #{tpu_custom_call.1} parent=1 // pred_fallthru
      _
    // Predicated region
    $region34: #{tpu_custom_call.1} parent=1 // pred_check
      _
    $region35: #{tpu_custom_call.1} parent=1 // pred_check_branch
      %91 = sbr.rel (0) target = $region37
    $region36: #{tpu_custom_call.1} parent=1 // pred_region
      %93 = dma.done [#allocation12], 2048
    $region37: #{tpu_custom_call.1} parent=1 // pred_fallthru
      _
    // Predicated region
    $region38: #{tpu_custom_call.1} parent=1 // pred_check
      _
    $region39: #{tpu_custom_call.1} parent=1 // pred_check_branch
      %95 = sbr.rel (0) target = $region41
    $region40: #{tpu_custom_call.1} parent=1 // pred_region
      %97 = dma.done [#allocation12], 64
    $region41: #{tpu_custom_call.1} parent=1 // pred_fallthru
      _
    %p98 = scmp.eq.s32.totalorder 0, 0
    %p99 = scmp.eq.s32.totalorder 0, 0
    %p100 = pnand %p98, %p99
    %p101 = pneg %p100
    // Predicated region
    $region42: #{tpu_custom_call.1} parent=1 // pred_check
      _
    $region43: #{tpu_custom_call.1} parent=1 // pred_check_branch
      %103 = sbr.rel (%p100) target = $region45
    $region44: #{tpu_custom_call.1} parent=1 // pred_region
      %s104 = scalar_lea.smem [#allocation15], 0
      %105 = sst [smem:[%s104]] -272.0
    $region45: #{tpu_custom_call.1} parent=1 // pred_fallthru
      _
    // Predicated region
    $region46: #{tpu_custom_call.1} parent=1 // pred_check
      %p106 = pneg %p99
    $region47: #{tpu_custom_call.1} parent=1 // pred_check_branch
      %108 = sbr.rel (%p106) target = $region49
    $region48: #{tpu_custom_call.1} parent=1 // pred_region
      %v109 = vld [vmem:[#allocation8] sm:$0xff]
      %v110 = vld [vmem:[#allocation8 + $0x8] sm:$0xff]
      %v111 = vld [vmem:[#allocation8 + $0x10] sm:$0xff]
      %v112 = vld [vmem:[#allocation8 + $0x18] sm:$0xff]
      %v113 = vld [vmem:[#allocation8 + $0x20] sm:$0xff]
      %v114 = vld [vmem:[#allocation8 + $0x28] sm:$0xff]
      %v115 = vld [vmem:[#allocation8 + $0x30] sm:$0xff]
      %v116 = vld [vmem:[#allocation8 + $0x38] sm:$0xff]
      %v117 = vld [vmem:[#allocation8 + $0x40] sm:$0xff]
      %v118 = vld [vmem:[#allocation8 + $0x48] sm:$0xff]
      %v119 = vld [vmem:[#allocation8 + $0x50] sm:$0xff]
      %v120 = vld [vmem:[#allocation8 + $0x58] sm:$0xff]
      %v121 = vld [vmem:[#allocation8 + $0x60] sm:$0xff]
      %v122 = vld [vmem:[#allocation8 + $0x68] sm:$0xff]
      %v123 = vld [vmem:[#allocation8 + $0x70] sm:$0xff]
      %v124 = vld [vmem:[#allocation8 + $0x78] sm:$0xff]
      %v125 = vld [vmem:[#allocation10] sm:$0xff]
      %v126 = vld [vmem:[#allocation10 + $0x8] sm:$0xff]
      %v127 = vld [vmem:[#allocation10 + $0x10] sm:$0xff]
      %v128 = vld [vmem:[#allocation10 + $0x18] sm:$0xff]
      %v129 = vld [vmem:[#allocation10 + $0x20] sm:$0xff]
      %v130 = vld [vmem:[#allocation10 + $0x28] sm:$0xff]
      %v131 = vld [vmem:[#allocation10 + $0x30] sm:$0xff]
      %v132 = vld [vmem:[#allocation10 + $0x38] sm:$0xff]
      %v133 = vld [vmem:[#allocation10 + $0x40] sm:$0xff]
      %v134 = vld [vmem:[#allocation10 + $0x48] sm:$0xff]
      %v135 = vld [vmem:[#allocation10 + $0x50] sm:$0xff]
      %v136 = vld [vmem:[#allocation10 + $0x58] sm:$0xff]
      %v137 = vld [vmem:[#allocation10 + $0x60] sm:$0xff]
      %v138 = vld [vmem:[#allocation10 + $0x68] sm:$0xff]
      %v139 = vld [vmem:[#allocation10 + $0x70] sm:$0xff]
      %v140 = vld [vmem:[#allocation10 + $0x78] sm:$0xff]
      %v141 = vmax.f32 %v125, 0.0
      %v142 = vmax.f32 %v126, 0.0
      %v143 = vmax.f32 %v127, 0.0
      %v144 = vmax.f32 %v128, 0.0
      %v145 = vmax.f32 %v129, 0.0
      %v146 = vmax.f32 %v130, 0.0
      %v147 = vmax.f32 %v131, 0.0
      %v148 = vmax.f32 %v132, 0.0
      %v149 = vmax.f32 %v133, 0.0
      %v150 = vmax.f32 %v134, 0.0
      %v151 = vmax.f32 %v135, 0.0
      %v152 = vmax.f32 %v136, 0.0
      %v153 = vmax.f32 %v137, 0.0
      %v154 = vmax.f32 %v138, 0.0
      %v155 = vmax.f32 %v139, 0.0
      %v156 = vmax.f32 %v140, 0.0
      %v157 = vand.u32 2147483647, %v125
      %v158 = vand.u32 2147483647, %v126
      %v159 = vand.u32 2147483647, %v127
      %v160 = vand.u32 2147483647, %v128
      %v161 = vand.u32 2147483647, %v129
      %v162 = vand.u32 2147483647, %v130
      %v163 = vand.u32 2147483647, %v131
      %v164 = vand.u32 2147483647, %v132
      %v165 = vand.u32 2147483647, %v133
      %v166 = vand.u32 2147483647, %v134
      %v167 = vand.u32 2147483647, %v135
      %v168 = vand.u32 2147483647, %v136
      %v169 = vand.u32 2147483647, %v137
      %v170 = vand.u32 2147483647, %v138
      %v171 = vand.u32 2147483647, %v139
      %v172 = vand.u32 2147483647, %v140
      %v173 = vsub.f32 0.0, %v157
      %v174 = vsub.f32 0.0, %v158
      %v175 = vsub.f32 0.0, %v159
      %v176 = vsub.f32 0.0, %v160
      %v177 = vsub.f32 0.0, %v161
      %v178 = vsub.f32 0.0, %v162
      %v179 = vsub.f32 0.0, %v163
      %v180 = vsub.f32 0.0, %v164
      %v181 = vsub.f32 0.0, %v165
      %v182 = vsub.f32 0.0, %v166
      %v183 = vsub.f32 0.0, %v167
      %v184 = vsub.f32 0.0, %v168
      %v185 = vsub.f32 0.0, %v169
      %v186 = vsub.f32 0.0, %v170
      %v187 = vsub.f32 0.0, %v171
      %v188 = vsub.f32 0.0, %v172
      %v189 = vmul.f32 %v173, 1.442695
      %v190 = vpow.pop %v189
      %v191 = vmul.f32 %v174, 1.442695
      %v192 = vpow.pop %v191
      %v193 = vmul.f32 %v175, 1.442695
      %v194 = vpow.pop %v193
      %v195 = vmul.f32 %v176, 1.442695
      %v196 = vpow.pop %v195
      %v197 = vmul.f32 %v177, 1.442695
      %v198 = vpow.pop %v197
      %v199 = vmul.f32 %v178, 1.442695
      %v200 = vpow.pop %v199
      %v201 = vmul.f32 %v179, 1.442695
      %v202 = vpow.pop %v201
      %v203 = vmul.f32 %v180, 1.442695
      %v204 = vpow.pop %v203
      %v205 = vmul.f32 %v181, 1.442695
      %v206 = vpow.pop %v205
      %v207 = vmul.f32 %v182, 1.442695
      %v208 = vpow.pop %v207
      %v209 = vmul.f32 %v183, 1.442695
      %v210 = vpow.pop %v209
      %v211 = vmul.f32 %v184, 1.442695
      %v212 = vpow.pop %v211
      %v213 = vmul.f32 %v185, 1.442695
      %v214 = vpow.pop %v213
      %v215 = vmul.f32 %v186, 1.442695
      %v216 = vpow.pop %v215
      %v217 = vmul.f32 %v187, 1.442695
      %v218 = vpow.pop %v217
      %v219 = vmul.f32 %v188, 1.442695
      %v220 = vpow.pop %v219
      %v221 = vadd.f32 %v190, 1.0
      %v222 = vadd.f32 %v192, 1.0
      %v223 = vadd.f32 %v194, 1.0
      %v224 = vadd.f32 %v196, 1.0
      %v225 = vadd.f32 %v198, 1.0
      %v226 = vadd.f32 %v200, 1.0
      %v227 = vadd.f32 %v202, 1.0
      %v228 = vadd.f32 %v204, 1.0
      %v229 = vadd.f32 %v206, 1.0
      %v230 = vadd.f32 %v208, 1.0
      %v231 = vadd.f32 %v210, 1.0
      %v232 = vadd.f32 %v212, 1.0
      %v233 = vadd.f32 %v214, 1.0
      %v234 = vadd.f32 %v216, 1.0
      %v235 = vadd.f32 %v218, 1.0
      %v236 = vadd.f32 %v220, 1.0
      %v237 = vlog2.pop %v221
      %v238 = vmul.f32 %v237, 0.6931472
      %v239 = vlog2.pop %v222
      %v240 = vmul.f32 %v239, 0.6931472
      %v241 = vlog2.pop %v223
      %v242 = vmul.f32 %v241, 0.6931472
      %v243 = vlog2.pop %v224
      %v244 = vmul.f32 %v243, 0.6931472
      %v245 = vlog2.pop %v225
      %v246 = vmul.f32 %v245, 0.6931472
      %v247 = vlog2.pop %v226
      %v248 = vmul.f32 %v247, 0.6931472
      %v249 = vlog2.pop %v227
      %v250 = vmul.f32 %v249, 0.6931472
      %v251 = vlog2.pop %v228
      %v252 = vmul.f32 %v251, 0.6931472
      %v253 = vlog2.pop %v229
      %v254 = vmul.f32 %v253, 0.6931472
      %v255 = vlog2.pop %v230
      %v256 = vmul.f32 %v255, 0.6931472
      %v257 = vlog2.pop %v231
      %v258 = vmul.f32 %v257, 0.6931472
      %v259 = vlog2.pop %v232
      %v260 = vmul.f32 %v259, 0.6931472
      %v261 = vlog2.pop %v233
      %v262 = vmul.f32 %v261, 0.6931472
      %v263 = vlog2.pop %v234
      %v264 = vmul.f32 %v263, 0.6931472
      %v265 = vlog2.pop %v235
      %v266 = vmul.f32 %v265, 0.6931472
      %v267 = vlog2.pop %v236
      %v268 = vmul.f32 %v267, 0.6931472
      %v269 = vadd.f32 %v141, %v238
      %v270 = vadd.f32 %v142, %v240
      %v271 = vadd.f32 %v143, %v242
      %v272 = vadd.f32 %v144, %v244
      %v273 = vadd.f32 %v145, %v246
      %v274 = vadd.f32 %v146, %v248
      %v275 = vadd.f32 %v147, %v250
      %v276 = vadd.f32 %v148, %v252
      %v277 = vadd.f32 %v149, %v254
      %v278 = vadd.f32 %v150, %v256
      %v279 = vadd.f32 %v151, %v258
      %v280 = vadd.f32 %v152, %v260
      %v281 = vadd.f32 %v153, %v262
      %v282 = vadd.f32 %v154, %v264
      %v283 = vadd.f32 %v155, %v266
      %v284 = vadd.f32 %v156, %v268
      %v285 = vld [vmem:[#allocation11] sm:$0xff]
      %v286 = vld [vmem:[#allocation11 + $0x8] sm:$0xff]
      %v287 = vld [vmem:[#allocation11 + $0x10] sm:$0xff]
      %v288 = vld [vmem:[#allocation11 + $0x18] sm:$0xff]
      %v289 = vld [vmem:[#allocation11 + $0x20] sm:$0xff]
      %v290 = vld [vmem:[#allocation11 + $0x28] sm:$0xff]
      %v291 = vld [vmem:[#allocation11 + $0x30] sm:$0xff]
      %v292 = vld [vmem:[#allocation11 + $0x38] sm:$0xff]
      %v293 = vld [vmem:[#allocation11 + $0x40] sm:$0xff]
      %v294 = vld [vmem:[#allocation11 + $0x48] sm:$0xff]
      %v295 = vld [vmem:[#allocation11 + $0x50] sm:$0xff]
      %v296 = vld [vmem:[#allocation11 + $0x58] sm:$0xff]
      %v297 = vld [vmem:[#allocation11 + $0x60] sm:$0xff]
      %v298 = vld [vmem:[#allocation11 + $0x68] sm:$0xff]
      %v299 = vld [vmem:[#allocation11 + $0x70] sm:$0xff]
      %v300 = vld [vmem:[#allocation11 + $0x78] sm:$0xff]
      %v301 = vmul.f32 %v285, %v269
      %v302 = vmul.f32 %v286, %v270
      %v303 = vmul.f32 %v287, %v271
      %v304 = vmul.f32 %v288, %v272
      %v305 = vmul.f32 %v289, %v273
      %v306 = vmul.f32 %v290, %v274
      %v307 = vmul.f32 %v291, %v275
      %v308 = vmul.f32 %v292, %v276
      %v309 = vmul.f32 %v293, %v277
      %v310 = vmul.f32 %v294, %v278
      %v311 = vmul.f32 %v295, %v279
      %v312 = vmul.f32 %v296, %v280
      %v313 = vmul.f32 %v297, %v281
      %v314 = vmul.f32 %v298, %v282
      %v315 = vmul.f32 %v299, %v283
      %v316 = vmul.f32 %v300, %v284
      %v317 = vadd.f32 %v109, %v301
      %v318 = vadd.f32 %v110, %v302
      %v319 = vadd.f32 %v111, %v303
      %v320 = vadd.f32 %v112, %v304
      %v321 = vadd.f32 %v113, %v305
      %v322 = vadd.f32 %v114, %v306
      %v323 = vadd.f32 %v115, %v307
      %v324 = vadd.f32 %v116, %v308
      %v325 = vadd.f32 %v117, %v309
      %v326 = vadd.f32 %v118, %v310
      %v327 = vadd.f32 %v119, %v311
      %v328 = vadd.f32 %v120, %v312
      %v329 = vadd.f32 %v121, %v313
      %v330 = vadd.f32 %v122, %v314
      %v331 = vadd.f32 %v123, %v315
      %v332 = vadd.f32 %v124, %v316
      %333 = vst [vmem:[#allocation2] sm:$0xff] %v317
      %334 = vst [vmem:[#allocation2 + $0x8] sm:$0xff] %v318
      %335 = vst [vmem:[#allocation2 + $0x10] sm:$0xff] %v319
      %336 = vst [vmem:[#allocation2 + $0x18] sm:$0xff] %v320
      %337 = vst [vmem:[#allocation2 + $0x20] sm:$0xff] %v321
      %338 = vst [vmem:[#allocation2 + $0x28] sm:$0xff] %v322
      %339 = vst [vmem:[#allocation2 + $0x30] sm:$0xff] %v323
      %340 = vst [vmem:[#allocation2 + $0x38] sm:$0xff] %v324
      %341 = vst [vmem:[#allocation2 + $0x40] sm:$0xff] %v325
      %342 = vst [vmem:[#allocation2 + $0x48] sm:$0xff] %v326
      %343 = vst [vmem:[#allocation2 + $0x50] sm:$0xff] %v327
      %344 = vst [vmem:[#allocation2 + $0x58] sm:$0xff] %v328
      %345 = vst [vmem:[#allocation2 + $0x60] sm:$0xff] %v329
      %346 = vst [vmem:[#allocation2 + $0x68] sm:$0xff] %v330
      %347 = vst [vmem:[#allocation2 + $0x70] sm:$0xff] %v331
      %348 = vst [vmem:[#allocation2 + $0x78] sm:$0xff] %v332
      %v349 = vld [vmem:[#allocation13] sm:$0x1]
      %v350 = vld [vmem:[#allocation13 + $0x1] sm:$0x1]
      %v351 = vmax.f32 %v350, 0.0
      %v352 = vand.u32 2147483647, %v350
      %v353 = vsub.f32 0.0, %v352
      %v354 = vmul.f32 %v353, 1.442695
      %v355 = vpow.pop %v354
      %v356 = vadd.f32 %v355, 1.0
      %v357 = vlog2.pop %v356
      %v358 = vmul.f32 %v357, 0.6931472
      %v359 = vadd.f32 %v351, %v358
      %v360 = vld [vmem:[#allocation13 + $0x2] sm:$0x1]
      %v361 = vmul.f32 %v360, %v359
      %v362 = vadd.f32 %v349, %v361
      %363 = vst [vmem:[#allocation3] sm:$0x1] %v362
      %v364 = vmul.f32 %v269, %v269
      %v365 = vmul.f32 %v270, %v270
      %v366 = vmul.f32 %v271, %v271
      %v367 = vmul.f32 %v272, %v272
      %v368 = vmul.f32 %v273, %v273
      %v369 = vmul.f32 %v274, %v274
      %v370 = vmul.f32 %v275, %v275
      %v371 = vmul.f32 %v276, %v276
      %v372 = vmul.f32 %v277, %v277
      %v373 = vmul.f32 %v278, %v278
      %v374 = vmul.f32 %v279, %v279
      %v375 = vmul.f32 %v280, %v280
      %v376 = vmul.f32 %v281, %v281
      %v377 = vmul.f32 %v282, %v282
      %v378 = vmul.f32 %v283, %v283
      %v379 = vmul.f32 %v284, %v284
      %v380 = vmul.f32 %v109, %v109
      %v381 = vmul.f32 %v110, %v110
      %v382 = vmul.f32 %v111, %v111
      %v383 = vmul.f32 %v112, %v112
      %v384 = vmul.f32 %v113, %v113
      %v385 = vmul.f32 %v114, %v114
      %v386 = vmul.f32 %v115, %v115
      %v387 = vmul.f32 %v116, %v116
      %v388 = vmul.f32 %v117, %v117
      %v389 = vmul.f32 %v118, %v118
      %v390 = vmul.f32 %v119, %v119
      %v391 = vmul.f32 %v120, %v120
      %v392 = vmul.f32 %v121, %v121
      %v393 = vmul.f32 %v122, %v122
      %v394 = vmul.f32 %v123, %v123
      %v395 = vmul.f32 %v124, %v124
      %v396 = vadd.f32 %v364, %v380
      %v397 = vadd.f32 %v365, %v381
      %v398 = vadd.f32 %v366, %v382
      %v399 = vadd.f32 %v367, %v383
      %v400 = vadd.f32 %v368, %v384
      %v401 = vadd.f32 %v369, %v385
      %v402 = vadd.f32 %v370, %v386
      %v403 = vadd.f32 %v371, %v387
      %v404 = vadd.f32 %v372, %v388
      %v405 = vadd.f32 %v373, %v389
      %v406 = vadd.f32 %v374, %v390
      %v407 = vadd.f32 %v375, %v391
      %v408 = vadd.f32 %v376, %v392
      %v409 = vadd.f32 %v377, %v393
      %v410 = vadd.f32 %v378, %v394
      %v411 = vadd.f32 %v379, %v395
      %v412 = vmul.f32 %v396, 0.5
      %v413 = vmul.f32 %v397, 0.5
      %v414 = vmul.f32 %v398, 0.5
      %v415 = vmul.f32 %v399, 0.5
      %v416 = vmul.f32 %v400, 0.5
      %v417 = vmul.f32 %v401, 0.5
      %v418 = vmul.f32 %v402, 0.5
      %v419 = vmul.f32 %v403, 0.5
      %v420 = vmul.f32 %v404, 0.5
      %v421 = vmul.f32 %v405, 0.5
      %v422 = vmul.f32 %v406, 0.5
      %v423 = vmul.f32 %v407, 0.5
      %v424 = vmul.f32 %v408, 0.5
      %v425 = vmul.f32 %v409, 0.5
      %v426 = vmul.f32 %v410, 0.5
      %v427 = vmul.f32 %v411, 0.5
      %v428 = vlog2.pop %v269
      %v429 = vmul.f32 %v428, 0.6931472
      %v430 = vlog2.pop %v270
      %v431 = vmul.f32 %v430, 0.6931472
      %v432 = vlog2.pop %v271
      %v433 = vmul.f32 %v432, 0.6931472
      %v434 = vlog2.pop %v272
      %v435 = vmul.f32 %v434, 0.6931472
      %v436 = vlog2.pop %v273
      %v437 = vmul.f32 %v436, 0.6931472
      %v438 = vlog2.pop %v274
      %v439 = vmul.f32 %v438, 0.6931472
      %v440 = vlog2.pop %v275
      %v441 = vmul.f32 %v440, 0.6931472
      %v442 = vlog2.pop %v276
      %v443 = vmul.f32 %v442, 0.6931472
      %v444 = vlog2.pop %v277
      %v445 = vmul.f32 %v444, 0.6931472
      %v446 = vlog2.pop %v278
      %v447 = vmul.f32 %v446, 0.6931472
      %v448 = vlog2.pop %v279
      %v449 = vmul.f32 %v448, 0.6931472
      %v450 = vlog2.pop %v280
      %v451 = vmul.f32 %v450, 0.6931472
      %v452 = vlog2.pop %v281
      %v453 = vmul.f32 %v452, 0.6931472
      %v454 = vlog2.pop %v282
      %v455 = vmul.f32 %v454, 0.6931472
      %v456 = vlog2.pop %v283
      %v457 = vmul.f32 %v456, 0.6931472
      %v458 = vlog2.pop %v284
      %v459 = vmul.f32 %v458, 0.6931472
      %v460 = vsub.f32 %v412, %v429
      %v461 = vsub.f32 %v413, %v431
      %v462 = vsub.f32 %v414, %v433
      %v463 = vsub.f32 %v415, %v435
      %v464 = vsub.f32 %v416, %v437
      %v465 = vsub.f32 %v417, %v439
      %v466 = vsub.f32 %v418, %v441
      %v467 = vsub.f32 %v419, %v443
      %v468 = vsub.f32 %v420, %v445
      %v469 = vsub.f32 %v421, %v447
      %v470 = vsub.f32 %v422, %v449
      %v471 = vsub.f32 %v423, %v451
      %v472 = vsub.f32 %v424, %v453
      %v473 = vsub.f32 %v425, %v455
      %v474 = vsub.f32 %v426, %v457
      %v475 = vsub.f32 %v427, %v459
      %v476 = vlaneseq
      %v477 = vshrl.u32 %v476, 7
      %v478 = vadd.s32 %v477, 8
      %v479 = vadd.s32 %v477, 16
      %v480 = vadd.s32 %v477, 24
      %v481 = vadd.s32 %v477, 32
      %v482 = vadd.s32 %v477, 40
      %v483 = vadd.s32 %v477, 48
      %v484 = vadd.s32 %v477, 56
      %v485 = vadd.s32 %v477, 64
      %v486 = vadd.s32 %v477, 72
      %v487 = vadd.s32 %v477, 80
      %v488 = vadd.s32 %v477, 88
      %v489 = vadd.s32 %v477, 96
      %v490 = vadd.s32 %v477, 104
      %v491 = vadd.s32 %v477, 112
      %v492 = vadd.s32 %v477, 120
      %vm493 = vcmp.lt.s32.totalorder %v477, 16
      %vm494 = vcmp.lt.s32.totalorder %v478, 16
      %vm495 = vcmp.lt.s32.totalorder %v479, 16
      %vm496 = vcmp.lt.s32.totalorder %v480, 16
      %vm497 = vcmp.lt.s32.totalorder %v481, 16
      %vm498 = vcmp.lt.s32.totalorder %v482, 16
      %vm499 = vcmp.lt.s32.totalorder %v483, 16
      %vm500 = vcmp.lt.s32.totalorder %v484, 16
      %vm501 = vcmp.lt.s32.totalorder %v485, 16
      %vm502 = vcmp.lt.s32.totalorder %v486, 16
      %vm503 = vcmp.lt.s32.totalorder %v487, 16
      %vm504 = vcmp.lt.s32.totalorder %v488, 16
      %vm505 = vcmp.lt.s32.totalorder %v489, 16
      %vm506 = vcmp.lt.s32.totalorder %v490, 16
      %vm507 = vcmp.lt.s32.totalorder %v491, 16
      %vm508 = vcmp.lt.s32.totalorder %v492, 16
      %s509 = smul.u32 0, 128
      %v510 = vlaneseq
      %v511 = vand.u32 %v510, 127
      %v512 = vstv %s509
      %v513 = vadd.s32 %v512, %v511
      %vm514 = vcmp.lt.s32.totalorder %v513, 32
      %vm515 = vmand %vm493, %vm514
      %vm516 = vmand %vm494, %vm514
      %vm517 = vmand %vm495, %vm514
      %vm518 = vmand %vm496, %vm514
      %vm519 = vmand %vm497, %vm514
      %vm520 = vmand %vm498, %vm514
      %vm521 = vmand %vm499, %vm514
      %vm522 = vmand %vm500, %vm514
      %vm523 = vmand %vm501, %vm514
      %vm524 = vmand %vm502, %vm514
      %vm525 = vmand %vm503, %vm514
      %vm526 = vmand %vm504, %vm514
      %vm527 = vmand %vm505, %vm514
      %vm528 = vmand %vm506, %vm514
      %vm529 = vmand %vm507, %vm514
      %vm530 = vmand %vm508, %vm514
      %v531 = vsel %vm515, %v460, 0.0
      %v532 = vsel %vm516, %v461, 0.0
      %v533 = vsel %vm517, %v462, 0.0
      %v534 = vsel %vm518, %v463, 0.0
      %v535 = vsel %vm519, %v464, 0.0
      %v536 = vsel %vm520, %v465, 0.0
      %v537 = vsel %vm521, %v466, 0.0
      %v538 = vsel %vm522, %v467, 0.0
      %v539 = vsel %vm523, %v468, 0.0
      %v540 = vsel %vm524, %v469, 0.0
      %v541 = vsel %vm525, %v470, 0.0
      %v542 = vsel %vm526, %v471, 0.0
      %v543 = vsel %vm527, %v472, 0.0
      %v544 = vsel %vm528, %v473, 0.0
      %v545 = vsel %vm529, %v474, 0.0
      %v546 = vsel %vm530, %v475, 0.0
      %v547 = vadd.f32 %v531, %v532
      %v548 = vadd.f32 %v547, %v533
      %v549 = vadd.f32 %v548, %v534
      %v550 = vadd.f32 %v549, %v535
      %v551 = vadd.f32 %v550, %v536
      %v552 = vadd.f32 %v551, %v537
      %v553 = vadd.f32 %v552, %v538
      %v554 = vadd.f32 %v553, %v539
      %v555 = vadd.f32 %v554, %v540
      %v556 = vadd.f32 %v555, %v541
      %v557 = vadd.f32 %v556, %v542
      %v558 = vadd.f32 %v557, %v543
      %v559 = vadd.f32 %v558, %v544
      %v560 = vadd.f32 %v559, %v545
      %v561 = vadd.f32 %v560, %v546
      %562 = vadd.xlane.f32.xlu0 %v561
      %v563 = vpop.xlane.xlu0 %562
      %v564 = vrot.slane %v563, 4
      %v565 = vadd.f32 %v563, %v564
      %v566 = vrot.slane %v565, 2
      %v567 = vadd.f32 %v565, %v566
      %v568 = vrot.slane %v567, 1
      %v569 = vadd.f32 %v567, %v568
      %s570 = vtos %v569
      %v571 = vmul.f32 %v359, %v359
      %v572 = vmul.f32 %v349, %v349
      %v573 = vadd.f32 %v571, %v572
      %v574 = vmul.f32 %v573, 0.5
      %v575 = vlog2.pop %v359
      %v576 = vmul.f32 %v575, 0.6931472
      %v577 = vsub.f32 %v574, %v576
      %v578 = vsel %vm514, %v577, 0.0
      %vm579 = vcmask 1040384
      %v580 = vsel %vm579, %v578, 0.0
      %581 = vadd.xlane.f32.xlu0 %v580
      %v582 = vpop.xlane.xlu0 %581
      %v583 = vrot.slane %v582, 4
      %v584 = vadd.f32 %v582, %v583
      %v585 = vrot.slane %v584, 2
      %v586 = vadd.f32 %v584, %v585
      %v587 = vrot.slane %v586, 1
      %v588 = vadd.f32 %v586, %v587
      %s589 = vtos %v588
      %s590 = sadd.f32 %s570, %s589
      %s591 = sld [smem:[#allocation15]]
      %s592 = sadd.f32 %s591, %s590
      %s593 = scalar_lea.smem [#allocation15], 0
      %594 = sst [smem:[%s593]] %s592
    $region49: #{tpu_custom_call.1} parent=1 // pred_fallthru
      _
    %v595 = vld [vmem:[#allocation4] sm:$0xff]
    %v596 = vld [vmem:[#allocation2] sm:$0xff]
    %v597 = vld [vmem:[#allocation2 + $0x8] sm:$0xff]
    %v598 = vld [vmem:[#allocation2 + $0x10] sm:$0xff]
    %v599 = vld [vmem:[#allocation2 + $0x18] sm:$0xff]
    %v600 = vld [vmem:[#allocation2 + $0x20] sm:$0xff]
    %v601 = vld [vmem:[#allocation2 + $0x28] sm:$0xff]
    %v602 = vld [vmem:[#allocation2 + $0x30] sm:$0xff]
    %v603 = vld [vmem:[#allocation2 + $0x38] sm:$0xff]
    %v604 = vld [vmem:[#allocation2 + $0x40] sm:$0xff]
    %v605 = vld [vmem:[#allocation2 + $0x48] sm:$0xff]
    %v606 = vld [vmem:[#allocation2 + $0x50] sm:$0xff]
    %v607 = vld [vmem:[#allocation2 + $0x58] sm:$0xff]
    %v608 = vld [vmem:[#allocation2 + $0x60] sm:$0xff]
    %v609 = vld [vmem:[#allocation2 + $0x68] sm:$0xff]
    %v610 = vld [vmem:[#allocation2 + $0x70] sm:$0xff]
    %v611 = vld [vmem:[#allocation2 + $0x78] sm:$0xff]
    %v612 = vld [vmem:[#allocation3] sm:$0x1]
    %v614 = vperm.slane %v612, 0
    %616 = vmatpush.msra.mxu0 %v611
    %617 = vmatpush.msra.mxu0 %v610
    %618 = vmatpush.msra.mxu0 %v609
    %619 = vmatpush.msra.mxu0 %v608
    %620 = vmatpush.msra.mxu0 %v607
    %621 = vmatpush.msra.mxu0 %v606
    %622 = vmatpush.msra.mxu0 %v605
    %623 = vmatpush.msra.mxu0 %v604
    %624 = vmatpush.msra.mxu0 %v603
    %625 = vmatpush.msra.mxu0 %v602
    %626 = vmatpush.msra.mxu0 %v601
    %627 = vmatpush.msra.mxu0 %v600
    %628 = vmatpush.msra.mxu0 %v599
    %629 = vmatpush.msra.mxu0 %v598
    %630 = vmatpush.msra.mxu0 %v597
    %631 = vmatpush.msra.mxu0 %v596
    %632 = vmatmul.f32.gmra.mxu0 %v595
    %v633 = vpop.f32.mrf.mxu0
    %v634 = vadd.f32 %v614, %v633
    %635 = vdwg.mxu0
    %636 = vst [vmem:[#allocation14] sm:$0xff] %v634
    // Predicated region
    $region50: #{tpu_custom_call.1} parent=1 // pred_check
      _
    $region51: #{tpu_custom_call.1} parent=1 // pred_check_branch
      %638 = sbr.rel (0) target = $region53
    $region52: #{tpu_custom_call.1} parent=1 // pred_region
      %640 = vsyncadd [#allocation6], 0
      %s642 = sshll.u32 [#allocation14], 4
      %s643 = int_to_ptr.vmem [resolvable:$true] %s642
      %s644 = sshll.u32 %s5, 4
      %s645 = int_to_ptr.hbm [resolvable:$true] %s644
      %647 = dma.vmem_to_hbm [thread:$0]  %s643, 128, %s645, [#allocation6]
    $region53: #{tpu_custom_call.1} parent=1 // pred_fallthru
      _
    // Predicated region
    $region54: #{tpu_custom_call.1} parent=1 // pred_check
      _
    $region55: #{tpu_custom_call.1} parent=1 // pred_check_branch
      %649 = sbr.rel (0) target = $region57
    $region56: #{tpu_custom_call.1} parent=1 // pred_region
      %651 = vsyncadd [#allocation7], 0
      %s653 = sshll.u32 %s6, 4
      %s654 = int_to_ptr.hbm [resolvable:$true] %s653
      %656 = dma.smem_to_hbm [#allocation15], 16, %s654, [#allocation7]
    $region57: #{tpu_custom_call.1} parent=1 // pred_fallthru
      _
    // Predicated region
    $region58: #{tpu_custom_call.1} parent=1 // pred_check
      _
    $region59: #{tpu_custom_call.1} parent=1 // pred_check_branch
      %658 = sbr.rel (0) target = $region61
    $region60: #{tpu_custom_call.1} parent=1 // pred_region
      %660 = dma.done [#allocation6], 128
    $region61: #{tpu_custom_call.1} parent=1 // pred_fallthru
      _
    // Predicated region
    $region62: #{tpu_custom_call.1} parent=1 // pred_check
      _
    $region63: #{tpu_custom_call.1} parent=1 // pred_check_branch
      %662 = sbr.rel (0) target = $region65
    $region64: #{tpu_custom_call.1} parent=1 // pred_region
      %664 = dma.done [#allocation7], 16
    $region65: #{tpu_custom_call.1} parent=1 // pred_fallthru
      _
    %665 = sfence
    %666 = vsyncpa [#allocation5], 1
    %667 = vsyncpa [#allocation9], 1
    %668 = vsyncpa [#allocation12], 1
    %669 = vsyncpa [#allocation6], 1
    %670 = vsyncpa [#allocation7], 1

</llo_original>
